<compile_context>
chip_gen: v6e
topology: v6e:2x2x1
jax: 0.10.0
libtpu: 0.0.40
codegen_flags: <defaults>
</compile_context>

<pallas_src>
import functools

import jax
import jax.numpy as jnp
from jax.experimental import pallas as pl
from jax.experimental.pallas import tpu as pltpu


def _round_up(x, m):
    return ((x + m - 1) // m) * m


def _mlp_kernel(x_ref, w1_ref, b1_ref, w2_ref, b2_ref, w3_ref, b3_ref, o_ref,
                *, compute_dtype):
    """Fused fc1 -> relu -> fc2 -> relu -> fc3 on one batch tile.

    Operands arrive in f32; MXU inputs are cast to `compute_dtype` in-kernel
    (bf16 by default), accumulation and all elementwise math stay f32.
    """
    x = x_ref[...].astype(compute_dtype)
    h1 = jnp.dot(x, w1_ref[...].astype(compute_dtype),
                 preferred_element_type=jnp.float32) + b1_ref[...]
    h1 = jnp.maximum(h1, 0.0)
    h2 = jnp.dot(h1.astype(compute_dtype), w2_ref[...].astype(compute_dtype),
                 preferred_element_type=jnp.float32) + b2_ref[...]
    h2 = jnp.maximum(h2, 0.0)
    out = jnp.dot(h2.astype(compute_dtype), w3_ref[...].astype(compute_dtype),
                  preferred_element_type=jnp.float32) + b3_ref[...]
    o_ref[...] = out.astype(o_ref.dtype)


@functools.partial(jax.jit, static_argnames=("tile_batch", "use_bf16"))
def agent_dqn_forward(state, params, *, tile_batch=8192, use_bf16=True):
    """Pallas-backed forward pass of AgentDQN.

    state:  [batch, input_dim] float32
    params: dict with w1 [in, fc1], b1 [1, fc1], w2 [fc1, fc2], b2 [1, fc2],
            w3 [fc2, n_actions], b3 [1, n_actions]   (W stored as [in, out])
    returns: [batch, n_actions] float32 Q-values.
    """
    batch, input_dim = state.shape
    fc1_dims = params["w1"].shape[1]
    fc2_dims = params["w2"].shape[1]
    n_actions = params["w3"].shape[1]

    compute_dtype = jnp.bfloat16 if use_bf16 else jnp.float32

    # Batch tile: f32 sublane alignment (8 rows), capped at tile_batch and also
    # capped so the grid has >=4 steps (>=2 per TensorCore on v7x megacore).
    # No padded copy of the state is materialized: the grid is cdiv(batch, tb)
    # and Pallas masks the ragged last tile (garbage rows are never written).
    row_align = 8
    tb = min(int(tile_batch), _round_up(pl.cdiv(batch, 4), row_align))
    tb = max(_round_up(tb, row_align), row_align)
    grid = (pl.cdiv(batch, tb),)

    # Activation tiles stream over the grid; weights/biases get constant
    # index_maps -> DMA'd once, VMEM-resident for every grid step.
    x_spec = pl.BlockSpec((tb, input_dim), lambda i: (i, 0))
    o_spec = pl.BlockSpec((tb, n_actions), lambda i: (i, 0))
    const = lambda shape: pl.BlockSpec(shape, lambda i: (0, 0))

    flops = 2 * batch * (input_dim * fc1_dims
                         + fc1_dims * fc2_dims
                         + fc2_dims * n_actions)
    bytes_accessed = (
        batch * input_dim * 4                             # x in (f32)
        + batch * n_actions * 4                           # out (f32, unpadded)
        + (input_dim * fc1_dims + fc1_dims * fc2_dims
           + fc2_dims * n_actions) * 4                    # weights (once)
        + (fc1_dims + fc2_dims + n_actions) * 4           # biases (once)
    )

    kernel = functools.partial(_mlp_kernel, compute_dtype=compute_dtype)

    out = pl.pallas_call(
        kernel,
        out_shape=jax.ShapeDtypeStruct((batch, n_actions), jnp.float32),
        grid=grid,
        in_specs=[
            x_spec,
            const((input_dim, fc1_dims)), const((1, fc1_dims)),
            const((fc1_dims, fc2_dims)), const((1, fc2_dims)),
            const((fc2_dims, n_actions)), const((1, n_actions)),
        ],
        out_specs=o_spec,
        compiler_params=pltpu.CompilerParams(
            dimension_semantics=("parallel",),          # megacore on v7x
            vmem_limit_bytes=32 * 1024 * 1024,          # v7x-safe (<48 MiB)
        ),
        cost_estimate=pl.CostEstimate(
            flops=flops, transcendentals=0, bytes_accessed=bytes_accessed),
    )(state, params["w1"], params["b1"],
      params["w2"], params["b2"],
      params["w3"], params["b3"])

    # Output is already exactly [batch, n_actions]: no post-call slice / copy.
    return out


def init_params(key, input_dim, fc1_dims, fc2_dims, n_actions):
    """Deterministic init mirroring nn.Linear's U(-1/sqrt(fan_in), 1/sqrt(fan_in))."""
    def linear(k, fan_in, fan_out):
        kw, kb = jax.random.split(k)
        bound = 1.0 / jnp.sqrt(jnp.float32(fan_in))
        w = jax.random.uniform(kw, (fan_in, fan_out), jnp.float32, -bound, bound)
        b = jax.random.uniform(kb, (1, fan_out), jnp.float32, -bound, bound)
        return w, b

    k1, k2, k3 = jax.random.split(key, 3)
    w1, b1 = linear(k1, input_dim, fc1_dims)
    w2, b2 = linear(k2, fc1_dims, fc2_dims)
    w3, b3 = linear(k3, fc2_dims, n_actions)
    return {"w1": w1, "b1": b1, "w2": w2, "b2": b2, "w3": w3, "b3": b3}


def _reference_forward(state, params, use_bf16):
    """Plain-JAX reference with the same precision policy as the kernel."""
    dt = jnp.bfloat16 if use_bf16 else jnp.float32
    h1 = jnp.maximum(
        jnp.dot(state.astype(dt), params["w1"].astype(dt),
                preferred_element_type=jnp.float32) + params["b1"], 0.0)
    h2 = jnp.maximum(
        jnp.dot(h1.astype(dt), params["w2"].astype(dt),
                preferred_element_type=jnp.float32) + params["b2"], 0.0)
    return jnp.dot(h2.astype(dt), params["w3"].astype(dt),
                   preferred_element_type=jnp.float32) + params["b3"]


if __name__ == "__main__":
    # Small shapes consistent with the module: input_dims=(16,), fc1=32, fc2=32, n_actions=4.
    batch, input_dim, fc1_dims, fc2_dims, n_actions = 8, 16, 32, 32, 4

    key = jax.random.PRNGKey(0)
    k_params, k_state, k_state2 = jax.random.split(key, 3)
    params = init_params(k_params, input_dim, fc1_dims, fc2_dims, n_actions)
    state = jax.random.normal(k_state, (batch, input_dim), jnp.float32)

    # bf16-MXU path (default, v6e/v7x full-rate path).
    actions_bf16 = jax.block_until_ready(
        agent_dqn_forward(state, params, use_bf16=True))
    ref_bf16 = _reference_forward(state, params, use_bf16=True)
    assert actions_bf16.shape == (batch, n_actions)
    assert jnp.allclose(actions_bf16, ref_bf16, atol=1e-3, rtol=1e-3)

    # Full-f32 path (closest to the PyTorch f64 semantics available on TPU).
    actions_f32 = jax.block_until_ready(
        agent_dqn_forward(state, params, use_bf16=False))
    ref_f32 = _reference_forward(state, params, use_bf16=False)
    assert actions_f32.shape == (batch, n_actions)
    assert jnp.allclose(actions_f32, ref_f32, atol=1e-5, rtol=1e-5)

    # bf16 path should still agree with the f32 math to bf16 precision.
    assert jnp.allclose(actions_bf16, ref_f32, atol=3e-2, rtol=3e-2)

    # Ragged-batch path: batch not a multiple of the tile -> cdiv grid with a
    # masked final tile (exercises the no-pad pipeline).
    batch2 = 50
    state2 = jax.random.normal(k_state2, (batch2, input_dim), jnp.float32)
    actions2 = jax.block_until_ready(
        agent_dqn_forward(state2, params, use_bf16=False))
    ref2 = _reference_forward(state2, params, use_bf16=False)
    assert actions2.shape == (batch2, n_actions)
    assert jnp.allclose(actions2, ref2, atol=1e-5, rtol=1e-5)

    print("KERNEL_OK")
</pallas_src>

<mosaic_0001>
module attributes {stable_mosaic.version = 11 : i64} {
  func.func @_mlp_kernel(%arg0: i32, %arg1: memref<8x16xf32, #tpu.memory_space<vmem>>, %arg2: memref<16x32xf32, #tpu.memory_space<vmem>>, %arg3: memref<1x32xf32, #tpu.memory_space<vmem>>, %arg4: memref<32x32xf32, #tpu.memory_space<vmem>>, %arg5: memref<1x32xf32, #tpu.memory_space<vmem>>, %arg6: memref<32x4xf32, #tpu.memory_space<vmem>>, %arg7: memref<1x4xf32, #tpu.memory_space<vmem>>, %arg8: memref<8x4xf32, #tpu.memory_space<vmem>>) attributes {dimension_semantics = [#tpu.dimension_semantics<parallel>], iteration_bounds = array<i64: 1>, scalar_prefetch = 0 : i64, scratch_operands = 0 : i64, tpu.core_type = #tpu.core_type<tc>, window_params = [{transform_indices = @transform_0, window_bounds = array<i64: 8, 16>}, {pipeline_mode = #tpu.pipeline_mode<synchronous>, transform_indices = @transform_1, window_bounds = array<i64: 16, 32>}, {pipeline_mode = #tpu.pipeline_mode<synchronous>, transform_indices = @transform_2, window_bounds = array<i64: 1, 32>}, {pipeline_mode = #tpu.pipeline_mode<synchronous>, transform_indices = @transform_3, window_bounds = array<i64: 32, 32>}, {pipeline_mode = #tpu.pipeline_mode<synchronous>, transform_indices = @transform_4, window_bounds = array<i64: 1, 32>}, {pipeline_mode = #tpu.pipeline_mode<synchronous>, transform_indices = @transform_5, window_bounds = array<i64: 32, 4>}, {pipeline_mode = #tpu.pipeline_mode<synchronous>, transform_indices = @transform_6, window_bounds = array<i64: 1, 4>}, {transform_indices = @transform_7, window_bounds = array<i64: 8, 4>}]} {
    %c0 = arith.constant 0 : index
    %c0_0 = arith.constant 0 : index
    %0 = vector.load %arg1[%c0, %c0_0] : memref<8x16xf32, #tpu.memory_space<vmem>>, vector<8x16xf32>
    %1 = arith.truncf %0 : vector<8x16xf32> to vector<8x16xbf16>
    %c0_1 = arith.constant 0 : index
    %c0_2 = arith.constant 0 : index
    %2 = vector.load %arg2[%c0_1, %c0_2] : memref<16x32xf32, #tpu.memory_space<vmem>>, vector<16x32xf32>
    %3 = arith.truncf %2 : vector<16x32xf32> to vector<16x32xbf16>
    %cst = arith.constant dense<0.000000e+00> : vector<8x32xf32>
    %4 = tpu.matmul %1, %3, %cst {dimension_numbers = #tpu.dot_dimension_numbers<[1], [0], [0], [1], [0, 0, 1, 1], [], []>} : vector<8x16xbf16>, vector<16x32xbf16>, vector<8x32xf32> -> vector<8x32xf32>
    %c0_3 = arith.constant 0 : index
    %c0_4 = arith.constant 0 : index
    %5 = vector.load %arg3[%c0_3, %c0_4] : memref<1x32xf32, #tpu.memory_space<vmem>>, vector<1x32xf32>
    %6 = vector.broadcast %5 : vector<1x32xf32> to vector<8x32xf32>
    %7 = arith.addf %4, %6 : vector<8x32xf32>
    %cst_5 = arith.constant 0.000000e+00 : f32
    %8 = vector.broadcast %cst_5 : f32 to vector<8x32xf32>
    %9 = arith.maximumf %7, %8 : vector<8x32xf32>
    %10 = arith.truncf %9 : vector<8x32xf32> to vector<8x32xbf16>
    %c0_6 = arith.constant 0 : index
    %c0_7 = arith.constant 0 : index
    %11 = vector.load %arg4[%c0_6, %c0_7] : memref<32x32xf32, #tpu.memory_space<vmem>>, vector<32x32xf32>
    %12 = arith.truncf %11 : vector<32x32xf32> to vector<32x32xbf16>
    %cst_8 = arith.constant dense<0.000000e+00> : vector<8x32xf32>
    %13 = tpu.matmul %10, %12, %cst_8 {dimension_numbers = #tpu.dot_dimension_numbers<[1], [0], [0], [1], [0, 0, 1, 1], [], []>} : vector<8x32xbf16>, vector<32x32xbf16>, vector<8x32xf32> -> vector<8x32xf32>
    %c0_9 = arith.constant 0 : index
    %c0_10 = arith.constant 0 : index
    %14 = vector.load %arg5[%c0_9, %c0_10] : memref<1x32xf32, #tpu.memory_space<vmem>>, vector<1x32xf32>
    %15 = vector.broadcast %14 : vector<1x32xf32> to vector<8x32xf32>
    %16 = arith.addf %13, %15 : vector<8x32xf32>
    %cst_11 = arith.constant 0.000000e+00 : f32
    %17 = vector.broadcast %cst_11 : f32 to vector<8x32xf32>
    %18 = arith.maximumf %16, %17 : vector<8x32xf32>
    %19 = arith.truncf %18 : vector<8x32xf32> to vector<8x32xbf16>
    %c0_12 = arith.constant 0 : index
    %c0_13 = arith.constant 0 : index
    %20 = vector.load %arg6[%c0_12, %c0_13] : memref<32x4xf32, #tpu.memory_space<vmem>>, vector<32x4xf32>
    %21 = arith.truncf %20 : vector<32x4xf32> to vector<32x4xbf16>
    %cst_14 = arith.constant dense<0.000000e+00> : vector<8x4xf32>
    %22 = tpu.matmul %19, %21, %cst_14 {dimension_numbers = #tpu.dot_dimension_numbers<[1], [0], [0], [1], [0, 0, 1, 1], [], []>} : vector<8x32xbf16>, vector<32x4xbf16>, vector<8x4xf32> -> vector<8x4xf32>
    %c0_15 = arith.constant 0 : index
    %c0_16 = arith.constant 0 : index
    %23 = vector.load %arg7[%c0_15, %c0_16] : memref<1x4xf32, #tpu.memory_space<vmem>>, vector<1x4xf32>
    %24 = vector.broadcast %23 : vector<1x4xf32> to vector<8x4xf32>
    %25 = arith.addf %22, %24 : vector<8x4xf32>
    %c0_17 = arith.constant 0 : index
    %c0_18 = arith.constant 0 : index
    %26 = vector.load %arg8[%c0_17, %c0_18] : memref<8x4xf32, #tpu.memory_space<vmem>>, vector<8x4xf32>
    tpu.vector_store %arg8[%c0_17, %c0_18], %25 {strides = array<i32>} : memref<8x4xf32, #tpu.memory_space<vmem>>, vector<8x4xf32>,
    return
  }
  func.func @transform_0(%arg0: i32) -> (i32, i32) {
    %c0_i32 = arith.constant 0 : i32
    %c0_i32_0 = arith.constant 0 : i32
    return %arg0, %c0_i32 : i32, i32
  }
  func.func @transform_1(%arg0: i32) -> (i32, i32) {
    %c0_i32 = arith.constant 0 : i32
    %c0_i32_0 = arith.constant 0 : i32
    %c0_i32_1 = arith.constant 0 : i32
    return %c0_i32, %c0_i32_0 : i32, i32
  }
  func.func @transform_2(%arg0: i32) -> (i32, i32) {
    %c0_i32 = arith.constant 0 : i32
    %c0_i32_0 = arith.constant 0 : i32
    %c0_i32_1 = arith.constant 0 : i32
    return %c0_i32, %c0_i32_0 : i32, i32
  }
  func.func @transform_3(%arg0: i32) -> (i32, i32) {
    %c0_i32 = arith.constant 0 : i32
    %c0_i32_0 = arith.constant 0 : i32
    %c0_i32_1 = arith.constant 0 : i32
    return %c0_i32, %c0_i32_0 : i32, i32
  }
  func.func @transform_4(%arg0: i32) -> (i32, i32) {
    %c0_i32 = arith.constant 0 : i32
    %c0_i32_0 = arith.constant 0 : i32
    %c0_i32_1 = arith.constant 0 : i32
    return %c0_i32, %c0_i32_0 : i32, i32
  }
  func.func @transform_5(%arg0: i32) -> (i32, i32) {
    %c0_i32 = arith.constant 0 : i32
    %c0_i32_0 = arith.constant 0 : i32
    %c0_i32_1 = arith.constant 0 : i32
    return %c0_i32, %c0_i32_0 : i32, i32
  }
  func.func @transform_6(%arg0: i32) -> (i32, i32) {
    %c0_i32 = arith.constant 0 : i32
    %c0_i32_0 = arith.constant 0 : i32
    %c0_i32_1 = arith.constant 0 : i32
    return %c0_i32, %c0_i32_0 : i32, i32
  }
  func.func @transform_7(%arg0: i32) -> (i32, i32) {
    %c0_i32 = arith.constant 0 : i32
    %c0_i32_0 = arith.constant 0 : i32
    return %arg0, %c0_i32 : i32, i32
  }
}

</mosaic_0001>

<llo_original>
// kernel: agent_dqn_forward.1
$region0: #{agent_dqn_forward.1}
  #allocation0 [shape = 'u32[]', space=smem, size = 0x4, offset = 0x4, fixed_abs, tag = 'smem constant byte address 0x4 - core index']
  #allocation1 [shape = 'u32[144,128]{1,0:T(1,128)}', space=vmem, size = 0x12000, scoped, tag = 'internal scratch']
  %s0 = inlined_call_operand.vmem [shape: f32[8,16], index: 0, kind: input, shape index: {}]
  %s1 = inlined_call_operand.hbm [shape: f32[16,32], index: 1, kind: input, shape index: {}]
  %s2 = inlined_call_operand.vmem [shape: f32[1,32], index: 2, kind: input, shape index: {}]
  %s3 = inlined_call_operand.vmem [shape: f32[32,32], index: 3, kind: input, shape index: {}]
  %s4 = inlined_call_operand.vmem [shape: f32[1,32], index: 4, kind: input, shape index: {}]
  %s5 = inlined_call_operand.vmem [shape: f32[32,4], index: 5, kind: input, shape index: {}]
  %s6 = inlined_call_operand.hbm [shape: f32[1,4], index: 6, kind: input, shape index: {}]
  %s7 = inlined_call_operand.vmem [shape: f32[8,4], index: 7, kind: output, shape index: {}]
  %s8 = sld [smem:[#allocation0]]
  $region46: #{agent_dqn_forward.1} parent=0
    _
  %s10 = ssub.s32 1, %s8
  %s11 = scalar_select 0, %s10, %s8
  $region1: #{agent_dqn_forward.1} parent=0
    #allocation2 [shape = 'u8[8192]{0}', space=vmem, size = 0x2000, scoped, tag = 'input window, operand 1, single buffered']
    #allocation3 [shape = 's32[1]{0}', space=sflag, size = 0x4, scoped, tag = 'scoped memory for agent_dqn_forward.1']
    #allocation4 [shape = 'u8[512]{0}', space=vmem, size = 0x400, scoped, tag = 'input window, operand 6, single buffered']
    #allocation5 [shape = 's32[1]{0}', space=sflag, size = 0x4, scoped, tag = 'scoped memory for agent_dqn_forward.1']
    %12 = vsyncpa [#allocation3], 0
    %13 = vsyncpa [#allocation5], 0
    // Predicated region
    $region2: #{agent_dqn_forward.1} parent=1 // pred_check
      _
    $region3: #{agent_dqn_forward.1} parent=1 // pred_check_branch
      %15 = sbr.rel (0) target = $region5
    $region4: #{agent_dqn_forward.1} parent=1 // pred_region
      _
    $region5: #{agent_dqn_forward.1} parent=1 // pred_fallthru
      _
    // Predicated region
    $region6: #{agent_dqn_forward.1} parent=1 // pred_check
      _
    $region7: #{agent_dqn_forward.1} parent=1 // pred_check_branch
      %17 = sbr.rel (0) target = $region9
    $region8: #{agent_dqn_forward.1} parent=1 // pred_region
      %s19 = ssub.s32 256, 256
      %20 = vsyncadd [#allocation3], %s19
      %s21 = sshll.u32 [#allocation2], 4
      %s22 = int_to_ptr.vmem [resolvable:$true] %s21
      %27 = dma.hbm_to_vmem [thread:$0]  %s1, 256, %s22, [#allocation3], 128, 128, 8
    $region9: #{agent_dqn_forward.1} parent=1 // pred_fallthru
      _
    // Predicated region
    $region10: #{agent_dqn_forward.1} parent=1 // pred_check
      _
    $region11: #{agent_dqn_forward.1} parent=1 // pred_check_branch
      %29 = sbr.rel (0) target = $region13
    $region12: #{agent_dqn_forward.1} parent=1 // pred_region
      _
    $region13: #{agent_dqn_forward.1} parent=1 // pred_fallthru
      _
    // Predicated region
    $region14: #{agent_dqn_forward.1} parent=1 // pred_check
      _
    $region15: #{agent_dqn_forward.1} parent=1 // pred_check_branch
      %31 = sbr.rel (0) target = $region17
    $region16: #{agent_dqn_forward.1} parent=1 // pred_region
      _
    $region17: #{agent_dqn_forward.1} parent=1 // pred_fallthru
      _
    // Predicated region
    $region18: #{agent_dqn_forward.1} parent=1 // pred_check
      _
    $region19: #{agent_dqn_forward.1} parent=1 // pred_check_branch
      %33 = sbr.rel (0) target = $region21
    $region20: #{agent_dqn_forward.1} parent=1 // pred_region
      _
    $region21: #{agent_dqn_forward.1} parent=1 // pred_fallthru
      _
    // Predicated region
    $region22: #{agent_dqn_forward.1} parent=1 // pred_check
      _
    $region23: #{agent_dqn_forward.1} parent=1 // pred_check_branch
      %35 = sbr.rel (0) target = $region25
    $region24: #{agent_dqn_forward.1} parent=1 // pred_region
      _
    $region25: #{agent_dqn_forward.1} parent=1 // pred_fallthru
      _
    // Predicated region
    $region26: #{agent_dqn_forward.1} parent=1 // pred_check
      _
    $region27: #{agent_dqn_forward.1} parent=1 // pred_check_branch
      %37 = sbr.rel (0) target = $region29
    $region28: #{agent_dqn_forward.1} parent=1 // pred_region
      %s39 = ssub.s32 16, 16
      %40 = vsyncadd [#allocation5], %s39
      %s42 = sshll.u32 [#allocation4], 4
      %s43 = int_to_ptr.vmem [resolvable:$true] %s42
      %45 = dma.hbm_to_vmem [thread:$0]  %s6, 16, %s43, [#allocation5]
    $region29: #{agent_dqn_forward.1} parent=1 // pred_fallthru
      _
    // Predicated region
    $region30: #{agent_dqn_forward.1} parent=1 // pred_check
      _
    $region31: #{agent_dqn_forward.1} parent=1 // pred_check_branch
      %47 = sbr.rel (0) target = $region33
    $region32: #{agent_dqn_forward.1} parent=1 // pred_region
      %48 = dma.done [#allocation3], 256
    $region33: #{agent_dqn_forward.1} parent=1 // pred_fallthru
      _
    // Predicated region
    $region34: #{agent_dqn_forward.1} parent=1 // pred_check
      _
    $region35: #{agent_dqn_forward.1} parent=1 // pred_check_branch
      %50 = sbr.rel (0) target = $region37
    $region36: #{agent_dqn_forward.1} parent=1 // pred_region
      %51 = dma.done [#allocation5], 16
    $region37: #{agent_dqn_forward.1} parent=1 // pred_fallthru
      _
    %v53 = vld [vmem:[%s0] sm:$0xff]
    %v54 = vpack.c.bf16 %v53, %v53
    %v55 = vld [vmem:[#allocation2] sm:$0xff]
    %v56 = vld [vmem:[#allocation2 + $0x8] sm:$0xff]
    %v57 = vpack.c.bf16 %v56, %v55
    %v58 = vld [vmem:[%s2] sm:$0x1]
    %v60 = vlaneseq
    %v61 = vshrl.u32 %v60, 7
    %v62 = vsub.s32 0, %v61
    %v63 = vrot.slane %v58, %v62
    %vm65 = vcmask 130048
    %v67 = vsel %vm65, %v54, 0
    %69 = vmatprep.subr.bf16.mxu0 0
    %70 = vmatpush1.bf16.msra.mxu0 0
    %71 = vmatprep.subr.bf16.mxu0 0
    %72 = vmatpush1.bf16.msra.mxu0 0
    %73 = vmatprep.subr.bf16.mxu0 0
    %74 = vmatpush1.bf16.msra.mxu0 0
    %75 = vmatprep.subr.bf16.mxu0 0
    %76 = vmatpush1.bf16.msra.mxu0 0
    %77 = vmatprep.subr.bf16.mxu0 0
    %78 = vmatpush1.bf16.msra.mxu0 0
    %79 = vmatprep.subr.bf16.mxu0 0
    %80 = vmatpush1.bf16.msra.mxu0 0
    %81 = vmatprep.subr.bf16.mxu0 0
    %82 = vmatpush1.bf16.msra.mxu0 0
    %83 = vmatprep.subr.bf16.mxu0 0
    %84 = vmatpush1.bf16.msra.mxu0 %v57
    %85 = vmatprep.subr.bf16.mxu0 0
    %86 = vmatpush2.bf16.msra.mxu0 0
    %87 = vmatprep.subr.bf16.mxu0 0
    %88 = vmatpush2.bf16.msra.mxu0 0
    %89 = vmatprep.subr.bf16.mxu0 0
    %90 = vmatpush2.bf16.msra.mxu0 0
    %91 = vmatprep.subr.bf16.mxu0 0
    %92 = vmatpush2.bf16.msra.mxu0 0
    %93 = vmatprep.subr.bf16.mxu0 0
    %94 = vmatpush2.bf16.msra.mxu0 0
    %95 = vmatprep.subr.bf16.mxu0 0
    %96 = vmatpush2.bf16.msra.mxu0 0
    %97 = vmatprep.subr.bf16.mxu0 0
    %98 = vmatpush2.bf16.msra.mxu0 0
    %99 = vmatprep.subr.bf16.mxu0 0
    %100 = vmatpush2.bf16.msra.mxu0 0
    %101 = vmatprep.mubr.bf16.mxu0 0
    %102 = vmatmul.mubr.bf16.gmra.mxu0 %v67
    %v103 = vpop.f32.mrf.mxu0
    %v104 = vadd.f32 %v63, %v103
    %v105 = vpop.f32.mrf.mxu0
    %v106 = vpop.f32.mrf.mxu0
    %v107 = vpop.f32.mrf.mxu0
    %108 = vdwg.mxu0
    %v109 = vmax.f32 %v104, 0.0
    %v110 = vpack.c.bf16 %v109, %v109
    %v111 = vld [vmem:[%s3] sm:$0xff]
    %v112 = vld [vmem:[%s3 + $0x8] sm:$0xff]
    %v113 = vld [vmem:[%s3 + $0x10] sm:$0xff]
    %v114 = vld [vmem:[%s3 + $0x18] sm:$0xff]
    %v115 = vpack.c.bf16 %v112, %v111
    %v116 = vpack.c.bf16 %v114, %v113
    %v117 = vld [vmem:[%s4] sm:$0x1]
    %v119 = vlaneseq
    %v120 = vshrl.u32 %v119, 7
    %v121 = vsub.s32 0, %v120
    %v122 = vrot.slane %v117, %v121
    %vm124 = vcmask 261120
    %v126 = vsel %vm124, %v110, 0
    %128 = vmatprep.subr.bf16.mxu0 0
    %129 = vmatpush1.bf16.msra.mxu0 0
    %130 = vmatprep.subr.bf16.mxu0 0
    %131 = vmatpush1.bf16.msra.mxu0 0
    %132 = vmatprep.subr.bf16.mxu0 0
    %133 = vmatpush1.bf16.msra.mxu0 0
    %134 = vmatprep.subr.bf16.mxu0 0
    %135 = vmatpush1.bf16.msra.mxu0 0
    %136 = vmatprep.subr.bf16.mxu0 0
    %137 = vmatpush1.bf16.msra.mxu0 0
    %138 = vmatprep.subr.bf16.mxu0 0
    %139 = vmatpush1.bf16.msra.mxu0 0
    %140 = vmatprep.subr.bf16.mxu0 0
    %141 = vmatpush1.bf16.msra.mxu0 %v116
    %142 = vmatprep.subr.bf16.mxu0 0
    %143 = vmatpush1.bf16.msra.mxu0 %v115
    %144 = vmatprep.subr.bf16.mxu0 0
    %145 = vmatpush2.bf16.msra.mxu0 0
    %146 = vmatprep.subr.bf16.mxu0 0
    %147 = vmatpush2.bf16.msra.mxu0 0
    %148 = vmatprep.subr.bf16.mxu0 0
    %149 = vmatpush2.bf16.msra.mxu0 0
    %150 = vmatprep.subr.bf16.mxu0 0
    %151 = vmatpush2.bf16.msra.mxu0 0
    %152 = vmatprep.subr.bf16.mxu0 0
    %153 = vmatpush2.bf16.msra.mxu0 0
    %154 = vmatprep.subr.bf16.mxu0 0
    %155 = vmatpush2.bf16.msra.mxu0 0
    %156 = vmatprep.subr.bf16.mxu0 0
    %157 = vmatpush2.bf16.msra.mxu0 0
    %158 = vmatprep.subr.bf16.mxu0 0
    %159 = vmatpush2.bf16.msra.mxu0 0
    %160 = vmatprep.mubr.bf16.mxu0 0
    %161 = vmatmul.mubr.bf16.gmra.mxu0 %v126
    %v162 = vpop.f32.mrf.mxu0
    %v163 = vadd.f32 %v122, %v162
    %v164 = vpop.f32.mrf.mxu0
    %v165 = vpop.f32.mrf.mxu0
    %v166 = vpop.f32.mrf.mxu0
    %167 = vdwg.mxu0
    %v168 = vmax.f32 %v163, 0.0
    %v169 = vpack.c.bf16 %v168, %v168
    %v170 = vld [vmem:[%s5] sm:$0xff]
    %v171 = vld [vmem:[%s5 + $0x8] sm:$0xff]
    %v172 = vld [vmem:[%s5 + $0x10] sm:$0xff]
    %v173 = vld [vmem:[%s5 + $0x18] sm:$0xff]
    %v174 = vpack.c.bf16 %v171, %v170
    %v175 = vpack.c.bf16 %v173, %v172
    %v176 = vld [vmem:[#allocation4] sm:$0x1]
    %v178 = vlaneseq
    %v179 = vshrl.u32 %v178, 7
    %v180 = vsub.s32 0, %v179
    %v181 = vrot.slane %v176, %v180
    %v184 = vsel %vm124, %v169, 0
    %186 = vmatprep.subr.bf16.mxu0 0
    %187 = vmatpush1.bf16.msra.mxu0 0
    %188 = vmatprep.subr.bf16.mxu0 0
    %189 = vmatpush1.bf16.msra.mxu0 0
    %190 = vmatprep.subr.bf16.mxu0 0
    %191 = vmatpush1.bf16.msra.mxu0 0
    %192 = vmatprep.subr.bf16.mxu0 0
    %193 = vmatpush1.bf16.msra.mxu0 0
    %194 = vmatprep.subr.bf16.mxu0 0
    %195 = vmatpush1.bf16.msra.mxu0 0
    %196 = vmatprep.subr.bf16.mxu0 0
    %197 = vmatpush1.bf16.msra.mxu0 0
    %198 = vmatprep.subr.bf16.mxu0 0
    %199 = vmatpush1.bf16.msra.mxu0 %v175
    %200 = vmatprep.subr.bf16.mxu0 0
    %201 = vmatpush1.bf16.msra.mxu0 %v174
    %202 = vmatprep.subr.bf16.mxu0 0
    %203 = vmatpush2.bf16.msra.mxu0 0
    %204 = vmatprep.subr.bf16.mxu0 0
    %205 = vmatpush2.bf16.msra.mxu0 0
    %206 = vmatprep.subr.bf16.mxu0 0
    %207 = vmatpush2.bf16.msra.mxu0 0
    %208 = vmatprep.subr.bf16.mxu0 0
    %209 = vmatpush2.bf16.msra.mxu0 0
    %210 = vmatprep.subr.bf16.mxu0 0
    %211 = vmatpush2.bf16.msra.mxu0 0
    %212 = vmatprep.subr.bf16.mxu0 0
    %213 = vmatpush2.bf16.msra.mxu0 0
    %214 = vmatprep.subr.bf16.mxu0 0
    %215 = vmatpush2.bf16.msra.mxu0 0
    %216 = vmatprep.subr.bf16.mxu0 0
    %217 = vmatpush2.bf16.msra.mxu0 0
    %218 = vmatprep.mubr.bf16.mxu0 0
    %219 = vmatmul.mubr.bf16.gmra.mxu0 %v184
    %v220 = vpop.f32.mrf.mxu0
    %v221 = vadd.f32 %v181, %v220
    %v222 = vpop.f32.mrf.mxu0
    %v223 = vpop.f32.mrf.mxu0
    %v224 = vpop.f32.mrf.mxu0
    %225 = vdwg.mxu0
    %vm226 = vcmask 31744
    %227 = vst.msk [vmem:[%s7] sm:$0xff] %vm226, %v221
    // Predicated region
    $region38: #{agent_dqn_forward.1} parent=1 // pred_check
      _
    $region39: #{agent_dqn_forward.1} parent=1 // pred_check_branch
      %229 = sbr.rel (0) target = $region41
    $region40: #{agent_dqn_forward.1} parent=1 // pred_region
      _
    $region41: #{agent_dqn_forward.1} parent=1 // pred_fallthru
      _
    // Predicated region
    $region42: #{agent_dqn_forward.1} parent=1 // pred_check
      _
    $region43: #{agent_dqn_forward.1} parent=1 // pred_check_branch
      %231 = sbr.rel (0) target = $region45
    $region44: #{agent_dqn_forward.1} parent=1 // pred_region
      _
    $region45: #{agent_dqn_forward.1} parent=1 // pred_fallthru
      _
    %232 = vsyncpa [#allocation3], 1
    %233 = vsyncpa [#allocation5], 1

</llo_original>
